<compile_context>
chip_gen: v7x
topology: tpu7x:2x2x1
jax: 0.10.0
libtpu: 0.0.40
codegen_flags: <defaults>
</compile_context>

<pallas_src>
import functools

import jax
import jax.numpy as jnp
import numpy as np
from jax.experimental import pallas as pl
from jax.experimental.pallas import tpu as pltpu


def _round_up(x, m):
    return ((x + m - 1) // m) * m


def _stable_softplus(rho):
    # softplus(rho) = max(rho, 0) + log1p(exp(-|rho|))  (no overflow for large rho)
    return jnp.maximum(rho, 0.0) + jnp.log1p(jnp.exp(-jnp.abs(rho)))


def _stable_log_sigma(rho, sigma):
    # log(softplus(rho)) ~= rho for very negative rho (avoids log(0) = -inf).
    return jnp.where(rho < -15.0, rho, jnp.log(jnp.maximum(sigma, 1e-30)))


def _bayesian_linear_kernel(inv_p2,
                            x_ref, wmu_ref, wrho_ref, epsw_ref,
                            bmu_ref, brho_ref, epsb_ref,
                            y_ref, kl_ref):
    k = pl.program_id(1)
    num_k = pl.num_programs(1)

    # --- reparameterized weight tile (f32) ------------------------------------
    wmu = wmu_ref[...]                       # [tn, tk]
    wrho = wrho_ref[...]
    w_sigma = _stable_softplus(wrho)
    w = wmu + w_sigma * epsw_ref[...]

    # --- MXU: contract last dims directly (no transpose), bf16 in / f32 acc ---
    part = jax.lax.dot_general(
        x_ref[...].astype(jnp.bfloat16),      # [B, tk]
        w.astype(jnp.bfloat16),               # [tn, tk]
        dimension_numbers=(((1,), (1,)), ((), ())),
        preferred_element_type=jnp.float32)   # -> [B, tn]

    # --- init resident output blocks at the first k step ----------------------
    @pl.when(k == 0)
    def _():
        y_ref[...] = jnp.zeros_like(y_ref)
        kl_ref[...] = jnp.zeros_like(kl_ref)

    y_ref[...] += part

    # --- KL partial for this weight tile (constant terms added in wrapper) ----
    # per-element: 0.5*inv_p2*(sigma^2 + mu^2) - log(sigma)    [+ const outside]
    log_ws = _stable_log_sigma(wrho, w_sigma)
    kl_part = 0.5 * inv_p2 * jnp.sum(w_sigma * w_sigma + wmu * wmu) - jnp.sum(log_ws)
    kl_ref[...] += kl_part                    # broadcast scalar into lane-dense tile

    # --- finalize: bias reparam + add, bias KL (once per out-tile) -------------
    @pl.when(k == num_k - 1)
    def _():
        bmu = bmu_ref[...]                    # [1, tn]
        brho = brho_ref[...]
        b_sigma = _stable_softplus(brho)
        b = bmu + b_sigma * epsb_ref[...]
        y_ref[...] = y_ref[...] + b           # broadcast over batch

        log_bs = _stable_log_sigma(brho, b_sigma)
        kl_b = 0.5 * inv_p2 * jnp.sum(b_sigma * b_sigma + bmu * bmu) - jnp.sum(log_bs)
        kl_ref[...] += kl_b


def bayesian_uncertainty_layer(x, weight_mu, weight_rho, bias_mu, bias_rho,
                               eps_w, eps_b, prior_std=1.0,
                               tile_n=512, tile_k=512):
    """Forward pass. Returns (y [batch, out_features] f32, kl_loss scalar f32)."""
    batch, in_features = x.shape
    out_features = weight_mu.shape[0]

    # KL-neutral padding: softplus(rho_pad) == prior_std and mu_pad == 0 makes a
    # padded element contribute exactly 0 to the KL; eps_pad == 0 makes the padded
    # weight value 0 so it contributes nothing to the matmul.
    rho_pad = float(np.log(np.expm1(prior_std)))

    tn = min(tile_n, _round_up(out_features, 128))
    tk = min(tile_k, _round_up(in_features, 128))
    out_pad = _round_up(out_features, tn)
    in_pad = _round_up(in_features, tk)
    batch_pad = _round_up(batch, 8)
    num_j = out_pad // tn
    num_k = in_pad // tk

    def pad2(a, rows, cols, val=0.0):
        a = a.astype(jnp.float32)
        return jnp.pad(a, ((0, rows - a.shape[0]), (0, cols - a.shape[1])),
                       constant_values=val)

    xp = pad2(x, batch_pad, in_pad)
    wmu = pad2(weight_mu, out_pad, in_pad)
    wrho = pad2(weight_rho, out_pad, in_pad, rho_pad)
    epsw = pad2(eps_w, out_pad, in_pad)
    bmu = pad2(bias_mu.reshape(1, -1), 1, out_pad)
    brho = pad2(bias_rho.reshape(1, -1), 1, out_pad, rho_pad)
    epsb = pad2(eps_b.reshape(1, -1), 1, out_pad)

    inv_p2 = float(1.0 / (prior_std * prior_std))
    log_p = float(np.log(prior_std))

    # VMEM budget: double-buffered inputs + resident outputs, plus slack.
    vmem_bytes = 2 * 4 * (batch_pad * tk            # x block
                          + 3 * tn * tk             # wmu, wrho, eps_w blocks
                          + 3 * tn                  # bias blocks
                          + batch_pad * tn          # y block
                          + 128)                    # kl block
    vmem_bytes = int(max(2 * vmem_bytes + (4 << 20), 16 << 20))

    cost = pl.CostEstimate(
        flops=2 * batch_pad * in_pad * out_pad,
        transcendentals=3 * out_pad * in_pad,       # exp, log1p, log per weight elem
        bytes_accessed=4 * (3 * out_pad * in_pad + batch_pad * in_pad
                            + batch_pad * out_pad + 3 * out_pad))

    y_pad, kl_parts = pl.pallas_call(
        functools.partial(_bayesian_linear_kernel, inv_p2),
        out_shape=(
            jax.ShapeDtypeStruct((batch_pad, out_pad), jnp.float32),
            jax.ShapeDtypeStruct((num_j, 1, 128), jnp.float32),
        ),
        grid=(num_j, num_k),
        in_specs=[
            pl.BlockSpec((batch_pad, tk), lambda j, k: (0, k)),   # x
            pl.BlockSpec((tn, tk), lambda j, k: (j, k)),          # weight_mu
            pl.BlockSpec((tn, tk), lambda j, k: (j, k)),          # weight_rho
            pl.BlockSpec((tn, tk), lambda j, k: (j, k)),          # eps_w
            pl.BlockSpec((1, tn), lambda j, k: (0, j)),           # bias_mu
            pl.BlockSpec((1, tn), lambda j, k: (0, j)),           # bias_rho
            pl.BlockSpec((1, tn), lambda j, k: (0, j)),           # eps_b
        ],
        out_specs=(
            pl.BlockSpec((batch_pad, tn), lambda j, k: (0, j)),   # y (resident over k)
            pl.BlockSpec((1, 1, 128), lambda j, k: (j, 0, 0)),    # per-j KL partials
        ),
        compiler_params=pltpu.CompilerParams(
            dimension_semantics=("parallel", "arbitrary"),
            vmem_limit_bytes=vmem_bytes),
        cost_estimate=cost,
    )(xp, wmu, wrho, epsw, bmu, brho, epsb)

    y = y_pad[:batch, :out_features]

    # Add the constant KL terms hoisted out of the kernel. Padded elements are
    # KL-neutral, so counting them here cancels their in-kernel contribution.
    n_total = out_pad * in_pad + out_pad
    kl = jnp.sum(kl_parts[:, 0, 0]) + n_total * (log_p - 0.5)
    return y, kl


def _reference(x, weight_mu, weight_rho, bias_mu, bias_rho, eps_w, eps_b,
               prior_std=1.0):
    """Pure-JAX reference matching the PyTorch module (bf16 MXU operands)."""
    w_sigma = jnp.log1p(jnp.exp(weight_rho))
    w = weight_mu + w_sigma * eps_w
    b_sigma = jnp.log1p(jnp.exp(bias_rho))
    b = bias_mu + b_sigma * eps_b
    y = jax.lax.dot_general(x.astype(jnp.bfloat16), w.astype(jnp.bfloat16),
                            dimension_numbers=(((1,), (1,)), ((), ())),
                            preferred_element_type=jnp.float32) + b
    kl_w = 0.5 * jnp.sum((w_sigma / prior_std) ** 2 + (weight_mu / prior_std) ** 2
                         - 2.0 * jnp.log(w_sigma / prior_std) - 1.0)
    kl_b = 0.5 * jnp.sum((b_sigma / prior_std) ** 2 + (bias_mu / prior_std) ** 2
                         - 2.0 * jnp.log(b_sigma / prior_std) - 1.0)
    return y, kl_w + kl_b


if __name__ == "__main__":
    key = jax.random.PRNGKey(0)
    k_x, k_wmu, k_wrho, k_brho, k_ew, k_eb = jax.random.split(key, 6)

    batch = 8
    in_features = 32
    out_features = 32
    prior_std = 1.0

    # Deterministic parameter init mirroring the torch __init__ distributions.
    x = jax.random.normal(k_x, (batch, in_features), dtype=jnp.float32)
    weight_mu = 0.1 * jax.random.normal(k_wmu, (out_features, in_features), dtype=jnp.float32)
    weight_rho = -3.0 * jax.random.normal(k_wrho, (out_features, in_features), dtype=jnp.float32)
    bias_mu = jnp.zeros((out_features,), dtype=jnp.float32)
    bias_rho = -3.0 * jax.random.normal(k_brho, (out_features,), dtype=jnp.float32)

    # Reparameterization noise (torch.randn_like equivalent, sampled host-side).
    eps_w = jax.random.normal(k_ew, (out_features, in_features), dtype=jnp.float32)
    eps_b = jax.random.normal(k_eb, (out_features,), dtype=jnp.float32)

    y, kl = bayesian_uncertainty_layer(
        x, weight_mu, weight_rho, bias_mu, bias_rho, eps_w, eps_b, prior_std)
    jax.block_until_ready((y, kl))

    y_ref, kl_ref = _reference(
        x, weight_mu, weight_rho, bias_mu, bias_rho, eps_w, eps_b, prior_std)

    np.testing.assert_allclose(np.asarray(y), np.asarray(y_ref), rtol=5e-3, atol=5e-3)
    np.testing.assert_allclose(np.asarray(kl), np.asarray(kl_ref), rtol=1e-4, atol=1e-2)

    print("KERNEL_OK")
</pallas_src>

<mosaic_0001>
module attributes {stable_mosaic.version = 11 : i64} {
  func.func @_bayesian_linear_kernel(%arg0: i32, %arg1: i32, %arg2: memref<8x128xf32, #tpu.memory_space<vmem>>, %arg3: memref<128x128xf32, #tpu.memory_space<vmem>>, %arg4: memref<128x128xf32, #tpu.memory_space<vmem>>, %arg5: memref<128x128xf32, #tpu.memory_space<vmem>>, %arg6: memref<1x128xf32, #tpu.memory_space<vmem>>, %arg7: memref<1x128xf32, #tpu.memory_space<vmem>>, %arg8: memref<1x128xf32, #tpu.memory_space<vmem>>, %arg9: memref<8x128xf32, #tpu.memory_space<vmem>>, %arg10: memref<1x1x128xf32, #tpu.memory_space<vmem>>) attributes {dimension_semantics = [#tpu.dimension_semantics<parallel>, #tpu.dimension_semantics<arbitrary>], iteration_bounds = array<i64: 1, 1>, scalar_prefetch = 0 : i64, scratch_operands = 0 : i64, tpu.core_type = #tpu.core_type<tc>, window_params = [{transform_indices = @transform_0, window_bounds = array<i64: 8, 128>}, {transform_indices = @transform_1, window_bounds = array<i64: 128, 128>}, {transform_indices = @transform_2, window_bounds = array<i64: 128, 128>}, {transform_indices = @transform_3, window_bounds = array<i64: 128, 128>}, {transform_indices = @transform_4, window_bounds = array<i64: 1, 128>}, {transform_indices = @transform_5, window_bounds = array<i64: 1, 128>}, {transform_indices = @transform_6, window_bounds = array<i64: 1, 128>}, {transform_indices = @transform_7, window_bounds = array<i64: 8, 128>}, {transform_indices = @transform_8, window_bounds = array<i64: 1, 1, 128>}]} {
    %c0 = arith.constant 0 : index
    %c0_0 = arith.constant 0 : index
    %0 = vector.load %arg3[%c0, %c0_0] : memref<128x128xf32, #tpu.memory_space<vmem>>, vector<128x128xf32>
    %c0_1 = arith.constant 0 : index
    %c0_2 = arith.constant 0 : index
    %1 = vector.load %arg4[%c0_1, %c0_2] : memref<128x128xf32, #tpu.memory_space<vmem>>, vector<128x128xf32>
    %cst = arith.constant 0.000000e+00 : f32
    %2 = vector.broadcast %cst : f32 to vector<128x128xf32>
    %3 = arith.maximumf %1, %2 : vector<128x128xf32>
    %4 = math.absf %1 : vector<128x128xf32>
    %cst_3 = arith.constant 0.000000e+00 : f32
    %5 = vector.broadcast %cst_3 : f32 to vector<128x128xf32>
    %6 = arith.subf %5, %4 : vector<128x128xf32>
    %7 = math.exp %6 : vector<128x128xf32>
    %8 = math.log1p %7 : vector<128x128xf32>
    %9 = arith.addf %3, %8 : vector<128x128xf32>
    %c0_4 = arith.constant 0 : index
    %c0_5 = arith.constant 0 : index
    %10 = vector.load %arg5[%c0_4, %c0_5] : memref<128x128xf32, #tpu.memory_space<vmem>>, vector<128x128xf32>
    %11 = arith.mulf %9, %10 : vector<128x128xf32>
    %12 = arith.addf %0, %11 : vector<128x128xf32>
    %c0_6 = arith.constant 0 : index
    %c0_7 = arith.constant 0 : index
    %13 = vector.load %arg2[%c0_6, %c0_7] : memref<8x128xf32, #tpu.memory_space<vmem>>, vector<8x128xf32>
    %14 = arith.truncf %13 : vector<8x128xf32> to vector<8x128xbf16>
    %15 = arith.truncf %12 : vector<128x128xf32> to vector<128x128xbf16>
    %cst_8 = arith.constant dense<0.000000e+00> : vector<8x128xf32>
    %16 = tpu.matmul %14, %15, %cst_8 {dimension_numbers = #tpu.dot_dimension_numbers<[1], [1], [0], [0], [0, 0, 1, 0], [], []>} : vector<8x128xbf16>, vector<128x128xbf16>, vector<8x128xf32> -> vector<8x128xf32>
    %c0_i32 = arith.constant 0 : i32
    %17 = arith.cmpi eq, %arg1, %c0_i32 : i32
    %18 = arith.extui %17 : i1 to i32
    %c0_i32_9 = arith.constant 0 : i32
    %19 = arith.cmpi ne, %18, %c0_i32_9 : i32
    scf.if %19 {
      %cst_27 = arith.constant 0.000000e+00 : f32
      %49 = vector.broadcast %cst_27 : f32 to vector<8x128xf32>
      %c0_28 = arith.constant 0 : index
      %c0_29 = arith.constant 0 : index
      %50 = vector.load %arg9[%c0_28, %c0_29] : memref<8x128xf32, #tpu.memory_space<vmem>>, vector<8x128xf32>
      tpu.vector_store %arg9[%c0_28, %c0_29], %49 {strides = array<i32>} : memref<8x128xf32, #tpu.memory_space<vmem>>, vector<8x128xf32>,
      %cst_30 = arith.constant 0.000000e+00 : f32
      %51 = vector.broadcast %cst_30 : f32 to vector<1x1x128xf32>
      %c0_31 = arith.constant 0 : index
      %c0_32 = arith.constant 0 : index
      %c0_33 = arith.constant 0 : index
      %52 = vector.load %arg10[%c0_31, %c0_32, %c0_33] : memref<1x1x128xf32, #tpu.memory_space<vmem>>, vector<1x1x128xf32>
      tpu.vector_store %arg10[%c0_31, %c0_32, %c0_33], %51 {strides = array<i32>} : memref<1x1x128xf32, #tpu.memory_space<vmem>>, vector<1x1x128xf32>,
    } else {
    }
    %c0_10 = arith.constant 0 : index
    %c0_11 = arith.constant 0 : index
    %20 = vector.load %arg9[%c0_10, %c0_11] : memref<8x128xf32, #tpu.memory_space<vmem>>, vector<8x128xf32>
    %21 = arith.addf %20, %16 : vector<8x128xf32>
    %c0_12 = arith.constant 0 : index
    %c0_13 = arith.constant 0 : index
    %22 = vector.load %arg9[%c0_12, %c0_13] : memref<8x128xf32, #tpu.memory_space<vmem>>, vector<8x128xf32>
    tpu.vector_store %arg9[%c0_12, %c0_13], %21 {strides = array<i32>} : memref<8x128xf32, #tpu.memory_space<vmem>>, vector<8x128xf32>,
    %cst_14 = arith.constant -1.500000e+01 : f32
    %23 = vector.broadcast %cst_14 : f32 to vector<128x128xf32>
    %24 = arith.cmpf olt, %1, %23 : vector<128x128xf32>
    %cst_15 = arith.constant 1.000000e-30 : f32
    %25 = vector.broadcast %cst_15 : f32 to vector<128x128xf32>
    %26 = arith.maximumf %9, %25 : vector<128x128xf32>
    %27 = math.log %26 : vector<128x128xf32>
    %28 = arith.select %24, %1, %27 : vector<128x128xi1>, vector<128x128xf32>
    %29 = arith.mulf %9, %9 : vector<128x128xf32>
    %30 = arith.mulf %0, %0 : vector<128x128xf32>
    %31 = arith.addf %29, %30 : vector<128x128xf32>
    %32 = vector.shape_cast %31 : vector<128x128xf32> to vector<1x128x128xf32>
    %cst_16 = arith.constant dense<0.000000e+00> : vector<1xf32>
    %33 = vector.multi_reduction <add>, %32, %cst_16 [1, 2] : vector<1x128x128xf32> to vector<1xf32>
    %34 = vector.shape_cast %33 : vector<1xf32> to vector<1x1x1xf32>
    %35 = vector.extract %34[0, 0, 0] : f32 from vector<1x1x1xf32>
    %cst_17 = arith.constant 5.000000e-01 : f32
    %36 = arith.mulf %cst_17, %35 : f32
    %37 = vector.shape_cast %28 : vector<128x128xf32> to vector<1x128x128xf32>
    %cst_18 = arith.constant dense<0.000000e+00> : vector<1xf32>
    %38 = vector.multi_reduction <add>, %37, %cst_18 [1, 2] : vector<1x128x128xf32> to vector<1xf32>
    %39 = vector.shape_cast %38 : vector<1xf32> to vector<1x1x1xf32>
    %40 = vector.extract %39[0, 0, 0] : f32 from vector<1x1x1xf32>
    %41 = arith.subf %36, %40 : f32
    %c0_19 = arith.constant 0 : index
    %c0_20 = arith.constant 0 : index
    %c0_21 = arith.constant 0 : index
    %42 = vector.load %arg10[%c0_19, %c0_20, %c0_21] : memref<1x1x128xf32, #tpu.memory_space<vmem>>, vector<1x1x128xf32>
    %43 = vector.broadcast %41 : f32 to vector<1x1x128xf32>
    %44 = arith.addf %42, %43 : vector<1x1x128xf32>
    %c0_22 = arith.constant 0 : index
    %c0_23 = arith.constant 0 : index
    %c0_24 = arith.constant 0 : index
    %45 = vector.load %arg10[%c0_22, %c0_23, %c0_24] : memref<1x1x128xf32, #tpu.memory_space<vmem>>, vector<1x1x128xf32>
    tpu.vector_store %arg10[%c0_22, %c0_23, %c0_24], %44 {strides = array<i32>} : memref<1x1x128xf32, #tpu.memory_space<vmem>>, vector<1x1x128xf32>,
    %c0_i32_25 = arith.constant 0 : i32
    %46 = arith.cmpi eq, %arg1, %c0_i32_25 : i32
    %47 = arith.extui %46 : i1 to i32
    %c0_i32_26 = arith.constant 0 : i32
    %48 = arith.cmpi ne, %47, %c0_i32_26 : i32
    scf.if %48 {
      %c0_27 = arith.constant 0 : index
      %c0_28 = arith.constant 0 : index
      %49 = vector.load %arg6[%c0_27, %c0_28] : memref<1x128xf32, #tpu.memory_space<vmem>>, vector<1x128xf32>
      %c0_29 = arith.constant 0 : index
      %c0_30 = arith.constant 0 : index
      %50 = vector.load %arg7[%c0_29, %c0_30] : memref<1x128xf32, #tpu.memory_space<vmem>>, vector<1x128xf32>
      %cst_31 = arith.constant 0.000000e+00 : f32
      %51 = vector.broadcast %cst_31 : f32 to vector<1x128xf32>
      %52 = arith.maximumf %50, %51 : vector<1x128xf32>
      %53 = math.absf %50 : vector<1x128xf32>
      %cst_32 = arith.constant 0.000000e+00 : f32
      %54 = vector.broadcast %cst_32 : f32 to vector<1x128xf32>
      %55 = arith.subf %54, %53 : vector<1x128xf32>
      %56 = math.exp %55 : vector<1x128xf32>
      %57 = math.log1p %56 : vector<1x128xf32>
      %58 = arith.addf %52, %57 : vector<1x128xf32>
      %c0_33 = arith.constant 0 : index
      %c0_34 = arith.constant 0 : index
      %59 = vector.load %arg8[%c0_33, %c0_34] : memref<1x128xf32, #tpu.memory_space<vmem>>, vector<1x128xf32>
      %60 = arith.mulf %58, %59 : vector<1x128xf32>
      %61 = arith.addf %49, %60 : vector<1x128xf32>
      %c0_35 = arith.constant 0 : index
      %c0_36 = arith.constant 0 : index
      %62 = vector.load %arg9[%c0_35, %c0_36] : memref<8x128xf32, #tpu.memory_space<vmem>>, vector<8x128xf32>
      %63 = vector.broadcast %61 : vector<1x128xf32> to vector<8x128xf32>
      %64 = arith.addf %62, %63 : vector<8x128xf32>
      %c0_37 = arith.constant 0 : index
      %c0_38 = arith.constant 0 : index
      %65 = vector.load %arg9[%c0_37, %c0_38] : memref<8x128xf32, #tpu.memory_space<vmem>>, vector<8x128xf32>
      tpu.vector_store %arg9[%c0_37, %c0_38], %64 {strides = array<i32>} : memref<8x128xf32, #tpu.memory_space<vmem>>, vector<8x128xf32>,
      %cst_39 = arith.constant -1.500000e+01 : f32
      %66 = vector.broadcast %cst_39 : f32 to vector<1x128xf32>
      %67 = arith.cmpf olt, %50, %66 : vector<1x128xf32>
      %cst_40 = arith.constant 1.000000e-30 : f32
      %68 = vector.broadcast %cst_40 : f32 to vector<1x128xf32>
      %69 = arith.maximumf %58, %68 : vector<1x128xf32>
      %70 = math.log %69 : vector<1x128xf32>
      %71 = arith.select %67, %50, %70 : vector<1x128xi1>, vector<1x128xf32>
      %72 = arith.mulf %58, %58 : vector<1x128xf32>
      %73 = arith.mulf %49, %49 : vector<1x128xf32>
      %74 = arith.addf %72, %73 : vector<1x128xf32>
      %75 = vector.shape_cast %74 : vector<1x128xf32> to vector<1x1x128xf32>
      %cst_41 = arith.constant dense<0.000000e+00> : vector<1xf32>
      %76 = vector.multi_reduction <add>, %75, %cst_41 [1, 2] : vector<1x1x128xf32> to vector<1xf32>
      %77 = vector.shape_cast %76 : vector<1xf32> to vector<1x1x1xf32>
      %78 = vector.extract %77[0, 0, 0] : f32 from vector<1x1x1xf32>
      %cst_42 = arith.constant 5.000000e-01 : f32
      %79 = arith.mulf %cst_42, %78 : f32
      %80 = vector.shape_cast %71 : vector<1x128xf32> to vector<1x1x128xf32>
      %cst_43 = arith.constant dense<0.000000e+00> : vector<1xf32>
      %81 = vector.multi_reduction <add>, %80, %cst_43 [1, 2] : vector<1x1x128xf32> to vector<1xf32>
      %82 = vector.shape_cast %81 : vector<1xf32> to vector<1x1x1xf32>
      %83 = vector.extract %82[0, 0, 0] : f32 from vector<1x1x1xf32>
      %84 = arith.subf %79, %83 : f32
      %c0_44 = arith.constant 0 : index
      %c0_45 = arith.constant 0 : index
      %c0_46 = arith.constant 0 : index
      %85 = vector.load %arg10[%c0_44, %c0_45, %c0_46] : memref<1x1x128xf32, #tpu.memory_space<vmem>>, vector<1x1x128xf32>
      %86 = vector.broadcast %84 : f32 to vector<1x1x128xf32>
      %87 = arith.addf %85, %86 : vector<1x1x128xf32>
      %c0_47 = arith.constant 0 : index
      %c0_48 = arith.constant 0 : index
      %c0_49 = arith.constant 0 : index
      %88 = vector.load %arg10[%c0_47, %c0_48, %c0_49] : memref<1x1x128xf32, #tpu.memory_space<vmem>>, vector<1x1x128xf32>
      tpu.vector_store %arg10[%c0_47, %c0_48, %c0_49], %87 {strides = array<i32>} : memref<1x1x128xf32, #tpu.memory_space<vmem>>, vector<1x1x128xf32>,
    } else {
    }
    return
  }
  func.func @transform_0(%arg0: i32, %arg1: i32) -> (i32, i32) {
    %c0_i32 = arith.constant 0 : i32
    %c0_i32_0 = arith.constant 0 : i32
    return %c0_i32, %arg1 : i32, i32
  }
  func.func @transform_1(%arg0: i32, %arg1: i32) -> (i32, i32) {
    %c0_i32 = arith.constant 0 : i32
    return %arg0, %arg1 : i32, i32
  }
  func.func @transform_2(%arg0: i32, %arg1: i32) -> (i32, i32) {
    %c0_i32 = arith.constant 0 : i32
    return %arg0, %arg1 : i32, i32
  }
  func.func @transform_3(%arg0: i32, %arg1: i32) -> (i32, i32) {
    %c0_i32 = arith.constant 0 : i32
    return %arg0, %arg1 : i32, i32
  }
  func.func @transform_4(%arg0: i32, %arg1: i32) -> (i32, i32) {
    %c0_i32 = arith.constant 0 : i32
    %c0_i32_0 = arith.constant 0 : i32
    return %c0_i32, %arg0 : i32, i32
  }
  func.func @transform_5(%arg0: i32, %arg1: i32) -> (i32, i32) {
    %c0_i32 = arith.constant 0 : i32
    %c0_i32_0 = arith.constant 0 : i32
    return %c0_i32, %arg0 : i32, i32
  }
  func.func @transform_6(%arg0: i32, %arg1: i32) -> (i32, i32) {
    %c0_i32 = arith.constant 0 : i32
    %c0_i32_0 = arith.constant 0 : i32
    return %c0_i32, %arg0 : i32, i32
  }
  func.func @transform_7(%arg0: i32, %arg1: i32) -> (i32, i32) {
    %c0_i32 = arith.constant 0 : i32
    %c0_i32_0 = arith.constant 0 : i32
    return %c0_i32, %arg0 : i32, i32
  }
  func.func @transform_8(%arg0: i32, %arg1: i32) -> (i32, i32, i32) {
    %c0_i32 = arith.constant 0 : i32
    %c0_i32_0 = arith.constant 0 : i32
    %c0_i32_1 = arith.constant 0 : i32
    return %arg0, %c0_i32, %c0_i32_0 : i32, i32, i32
  }
}

</mosaic_0001>

<llo_original>
// kernel: tpu_custom_call.1
$region0: #{tpu_custom_call.1}
  #allocation0 [shape = 'u32[]', space=smem, size = 0x4, offset = 0x4, fixed_abs, tag = 'smem constant byte address 0x4 - core index']
  #allocation1 [shape = 'u32[144,128]{1,0:T(1,128)}', space=vmem, size = 0x12000, scoped, tag = 'internal scratch']
  %s0 = inlined_call_operand.hbm [shape: f32[8,128], index: 0, kind: input, shape index: {}]
  %s1 = inlined_call_operand.hbm [shape: f32[128,128], index: 1, kind: input, shape index: {}]
  %s2 = inlined_call_operand.hbm [shape: f32[128,128], index: 2, kind: input, shape index: {}]
  %s3 = inlined_call_operand.hbm [shape: f32[128,128], index: 3, kind: input, shape index: {}]
  %s4 = inlined_call_operand.vmem [shape: f32[1,128], index: 4, kind: input, shape index: {}]
  %s5 = inlined_call_operand.vmem [shape: f32[1,128], index: 5, kind: input, shape index: {}]
  %s6 = inlined_call_operand.vmem [shape: f32[1,128], index: 6, kind: input, shape index: {}]
  %s7 = inlined_call_operand.hbm [shape: f32[8,128], index: 7, kind: output, shape index: {0}]
  %s8 = inlined_call_operand.hbm [shape: f32[1,1,128], index: 8, kind: output, shape index: {1}]
  %9 = xla_tuple %s7, %s8
  %s10 = sld [smem:[#allocation0]]
  $region70: #{tpu_custom_call.1} parent=0
    _
  %s12 = ssub.s32 1, %s10
  %s13 = scalar_select 0, %s12, %s10
  $region1: #{tpu_custom_call.1} parent=0
    #allocation2 [shape = 'u8[4096]{0}', space=vmem, size = 0x1000, scoped, tag = 'input window, operand 0, single buffered']
    #allocation3 [shape = 's32[1]{0}', space=sflag, size = 0x4, scoped, tag = 'scoped memory for tpu_custom_call.1']
    #allocation4 [shape = 's32[1]{0}', space=sflag, size = 0x4, scoped, tag = 'scoped memory for tpu_custom_call.1']
    #allocation5 [shape = 'u8[65536]{0}', space=vmem, size = 0x10000, scoped, tag = 'input window, operand 1, single buffered']
    #allocation6 [shape = 's32[1]{0}', space=sflag, size = 0x4, scoped, tag = 'scoped memory for tpu_custom_call.1']
    #allocation7 [shape = 'u8[65536]{0}', space=vmem, size = 0x10000, scoped, tag = 'input window, operand 2, single buffered']
    #allocation8 [shape = 'u8[65536]{0}', space=vmem, size = 0x10000, scoped, tag = 'input window, operand 3, single buffered']
    #allocation9 [shape = 's32[1]{0}', space=sflag, size = 0x4, scoped, tag = 'scoped memory for tpu_custom_call.1']
    #allocation10 [shape = 'u8[4096]{0}', space=vmem, size = 0x1000, scoped, tag = 'output window, operand 0, single buffered']
    #allocation11 [shape = 'u8[512]{0}', space=vmem, size = 0x400, scoped, tag = 'output window, operand 1, single buffered']
    #allocation12 [shape = 's32[1]{0}', space=sflag, size = 0x4, scoped, tag = 'scoped memory for tpu_custom_call.1']
    %14 = vsyncpa [#allocation3], 0
    %15 = vsyncpa [#allocation6], 0
    %16 = vsyncpa [#allocation9], 0
    %17 = vsyncpa [#allocation4], 0
    %18 = vsyncpa [#allocation12], 0
    // Predicated region
    $region2: #{tpu_custom_call.1} parent=1 // pred_check
      _
    $region3: #{tpu_custom_call.1} parent=1 // pred_check_branch
      %20 = sbr.rel (0) target = $region5
    $region4: #{tpu_custom_call.1} parent=1 // pred_region
      %s22 = ssub.s32 128, 128
      %23 = vsyncadd [#allocation3], %s22
      %s25 = sshll.u32 [#allocation2], 4
      %s26 = int_to_ptr.vmem [resolvable:$true] %s25
      %28 = dma.hbm_to_vmem [thread:$0]  %s0, 128, %s26, [#allocation3]
    $region5: #{tpu_custom_call.1} parent=1 // pred_fallthru
      _
    // Predicated region
    $region6: #{tpu_custom_call.1} parent=1 // pred_check
      _
    $region7: #{tpu_custom_call.1} parent=1 // pred_check_branch
      %30 = sbr.rel (0) target = $region9
    $region8: #{tpu_custom_call.1} parent=1 // pred_region
      %s32 = ssub.s32 2048, 2048
      %33 = vsyncadd [#allocation6], %s32
      %s34 = sshll.u32 [#allocation5], 4
      %s35 = int_to_ptr.vmem [resolvable:$true] %s34
      %40 = dma.hbm_to_vmem [thread:$0]  %s1, 2048, %s35, [#allocation6], 128, 128, 8
    $region9: #{tpu_custom_call.1} parent=1 // pred_fallthru
      _
    // Predicated region
    $region10: #{tpu_custom_call.1} parent=1 // pred_check
      _
    $region11: #{tpu_custom_call.1} parent=1 // pred_check_branch
      %42 = sbr.rel (0) target = $region13
    $region12: #{tpu_custom_call.1} parent=1 // pred_region
      %s44 = ssub.s32 2048, 2048
      %45 = vsyncadd [#allocation6], %s44
      %s46 = sshll.u32 [#allocation7], 4
      %s47 = int_to_ptr.vmem [resolvable:$true] %s46
      %52 = dma.hbm_to_vmem [thread:$0]  %s2, 2048, %s47, [#allocation6], 128, 128, 8
    $region13: #{tpu_custom_call.1} parent=1 // pred_fallthru
      _
    // Predicated region
    $region14: #{tpu_custom_call.1} parent=1 // pred_check
      _
    $region15: #{tpu_custom_call.1} parent=1 // pred_check_branch
      %54 = sbr.rel (0) target = $region17
    $region16: #{tpu_custom_call.1} parent=1 // pred_region
      %s56 = ssub.s32 2048, 2048
      %57 = vsyncadd [#allocation9], %s56
      %s58 = sshll.u32 [#allocation8], 4
      %s59 = int_to_ptr.vmem [resolvable:$true] %s58
      %64 = dma.hbm_to_vmem [thread:$0]  %s3, 2048, %s59, [#allocation9], 128, 128, 8
    $region17: #{tpu_custom_call.1} parent=1 // pred_fallthru
      _
    // Predicated region
    $region18: #{tpu_custom_call.1} parent=1 // pred_check
      _
    $region19: #{tpu_custom_call.1} parent=1 // pred_check_branch
      %66 = sbr.rel (0) target = $region21
    $region20: #{tpu_custom_call.1} parent=1 // pred_region
      _
    $region21: #{tpu_custom_call.1} parent=1 // pred_fallthru
      _
    // Predicated region
    $region22: #{tpu_custom_call.1} parent=1 // pred_check
      _
    $region23: #{tpu_custom_call.1} parent=1 // pred_check_branch
      %68 = sbr.rel (0) target = $region25
    $region24: #{tpu_custom_call.1} parent=1 // pred_region
      _
    $region25: #{tpu_custom_call.1} parent=1 // pred_fallthru
      _
    // Predicated region
    $region26: #{tpu_custom_call.1} parent=1 // pred_check
      _
    $region27: #{tpu_custom_call.1} parent=1 // pred_check_branch
      %70 = sbr.rel (0) target = $region29
    $region28: #{tpu_custom_call.1} parent=1 // pred_region
      _
    $region29: #{tpu_custom_call.1} parent=1 // pred_fallthru
      _
    // Predicated region
    $region30: #{tpu_custom_call.1} parent=1 // pred_check
      _
    $region31: #{tpu_custom_call.1} parent=1 // pred_check_branch
      %72 = sbr.rel (0) target = $region33
    $region32: #{tpu_custom_call.1} parent=1 // pred_region
      %73 = dma.done [#allocation3], 128
    $region33: #{tpu_custom_call.1} parent=1 // pred_fallthru
      _
    // Predicated region
    $region34: #{tpu_custom_call.1} parent=1 // pred_check
      _
    $region35: #{tpu_custom_call.1} parent=1 // pred_check_branch
      %75 = sbr.rel (0) target = $region37
    $region36: #{tpu_custom_call.1} parent=1 // pred_region
      %76 = dma.done [#allocation6], 2048
    $region37: #{tpu_custom_call.1} parent=1 // pred_fallthru
      _
    // Predicated region
    $region38: #{tpu_custom_call.1} parent=1 // pred_check
      _
    $region39: #{tpu_custom_call.1} parent=1 // pred_check_branch
      %78 = sbr.rel (0) target = $region41
    $region40: #{tpu_custom_call.1} parent=1 // pred_region
      %79 = dma.done [#allocation6], 2048
    $region41: #{tpu_custom_call.1} parent=1 // pred_fallthru
      _
    // Predicated region
    $region42: #{tpu_custom_call.1} parent=1 // pred_check
      _
    $region43: #{tpu_custom_call.1} parent=1 // pred_check_branch
      %81 = sbr.rel (0) target = $region45
    $region44: #{tpu_custom_call.1} parent=1 // pred_region
      %82 = dma.done [#allocation9], 2048
    $region45: #{tpu_custom_call.1} parent=1 // pred_fallthru
      _
    %v84 = vld [vmem:[#allocation5] sm:$0xff]
    %v85 = vld [vmem:[#allocation5 + $0x8] sm:$0xff]
    %v86 = vld [vmem:[#allocation5 + $0x10] sm:$0xff]
    %v87 = vld [vmem:[#allocation5 + $0x18] sm:$0xff]
    %v88 = vld [vmem:[#allocation5 + $0x20] sm:$0xff]
    %v89 = vld [vmem:[#allocation5 + $0x28] sm:$0xff]
    %v90 = vld [vmem:[#allocation5 + $0x30] sm:$0xff]
    %v91 = vld [vmem:[#allocation5 + $0x38] sm:$0xff]
    %v92 = vld [vmem:[#allocation5 + $0x40] sm:$0xff]
    %v93 = vld [vmem:[#allocation5 + $0x48] sm:$0xff]
    %v94 = vld [vmem:[#allocation5 + $0x50] sm:$0xff]
    %v95 = vld [vmem:[#allocation5 + $0x58] sm:$0xff]
    %v96 = vld [vmem:[#allocation5 + $0x60] sm:$0xff]
    %v97 = vld [vmem:[#allocation5 + $0x68] sm:$0xff]
    %v98 = vld [vmem:[#allocation5 + $0x70] sm:$0xff]
    %v99 = vld [vmem:[#allocation5 + $0x78] sm:$0xff]
    %v100 = vld [vmem:[#allocation7] sm:$0xff]
    %v101 = vld [vmem:[#allocation7 + $0x8] sm:$0xff]
    %v102 = vld [vmem:[#allocation7 + $0x10] sm:$0xff]
    %v103 = vld [vmem:[#allocation7 + $0x18] sm:$0xff]
    %v104 = vld [vmem:[#allocation7 + $0x20] sm:$0xff]
    %v105 = vld [vmem:[#allocation7 + $0x28] sm:$0xff]
    %v106 = vld [vmem:[#allocation7 + $0x30] sm:$0xff]
    %v107 = vld [vmem:[#allocation7 + $0x38] sm:$0xff]
    %v108 = vld [vmem:[#allocation7 + $0x40] sm:$0xff]
    %v109 = vld [vmem:[#allocation7 + $0x48] sm:$0xff]
    %v110 = vld [vmem:[#allocation7 + $0x50] sm:$0xff]
    %v111 = vld [vmem:[#allocation7 + $0x58] sm:$0xff]
    %v112 = vld [vmem:[#allocation7 + $0x60] sm:$0xff]
    %v113 = vld [vmem:[#allocation7 + $0x68] sm:$0xff]
    %v114 = vld [vmem:[#allocation7 + $0x70] sm:$0xff]
    %v115 = vld [vmem:[#allocation7 + $0x78] sm:$0xff]
    %v116 = vmax.f32 %v100, 0.0
    %v117 = vmax.f32 %v101, 0.0
    %v118 = vmax.f32 %v102, 0.0
    %v119 = vmax.f32 %v103, 0.0
    %v120 = vmax.f32 %v104, 0.0
    %v121 = vmax.f32 %v105, 0.0
    %v122 = vmax.f32 %v106, 0.0
    %v123 = vmax.f32 %v107, 0.0
    %v124 = vmax.f32 %v108, 0.0
    %v125 = vmax.f32 %v109, 0.0
    %v126 = vmax.f32 %v110, 0.0
    %v127 = vmax.f32 %v111, 0.0
    %v128 = vmax.f32 %v112, 0.0
    %v129 = vmax.f32 %v113, 0.0
    %v130 = vmax.f32 %v114, 0.0
    %v131 = vmax.f32 %v115, 0.0
    %v132 = vand.u32 2147483647, %v100
    %v133 = vand.u32 2147483647, %v101
    %v134 = vand.u32 2147483647, %v102
    %v135 = vand.u32 2147483647, %v103
    %v136 = vand.u32 2147483647, %v104
    %v137 = vand.u32 2147483647, %v105
    %v138 = vand.u32 2147483647, %v106
    %v139 = vand.u32 2147483647, %v107
    %v140 = vand.u32 2147483647, %v108
    %v141 = vand.u32 2147483647, %v109
    %v142 = vand.u32 2147483647, %v110
    %v143 = vand.u32 2147483647, %v111
    %v144 = vand.u32 2147483647, %v112
    %v145 = vand.u32 2147483647, %v113
    %v146 = vand.u32 2147483647, %v114
    %v147 = vand.u32 2147483647, %v115
    %v148 = vsub.f32 0.0, %v132
    %v149 = vsub.f32 0.0, %v133
    %v150 = vsub.f32 0.0, %v134
    %v151 = vsub.f32 0.0, %v135
    %v152 = vsub.f32 0.0, %v136
    %v153 = vsub.f32 0.0, %v137
    %v154 = vsub.f32 0.0, %v138
    %v155 = vsub.f32 0.0, %v139
    %v156 = vsub.f32 0.0, %v140
    %v157 = vsub.f32 0.0, %v141
    %v158 = vsub.f32 0.0, %v142
    %v159 = vsub.f32 0.0, %v143
    %v160 = vsub.f32 0.0, %v144
    %v161 = vsub.f32 0.0, %v145
    %v162 = vsub.f32 0.0, %v146
    %v163 = vsub.f32 0.0, %v147
    %v164 = vmul.f32 %v148, 1.442695
    %v165 = vpow.pop %v164
    %v166 = vmul.f32 %v149, 1.442695
    %v167 = vpow.pop %v166
    %v168 = vmul.f32 %v150, 1.442695
    %v169 = vpow.pop %v168
    %v170 = vmul.f32 %v151, 1.442695
    %v171 = vpow.pop %v170
    %v172 = vmul.f32 %v152, 1.442695
    %v173 = vpow.pop %v172
    %v174 = vmul.f32 %v153, 1.442695
    %v175 = vpow.pop %v174
    %v176 = vmul.f32 %v154, 1.442695
    %v177 = vpow.pop %v176
    %v178 = vmul.f32 %v155, 1.442695
    %v179 = vpow.pop %v178
    %v180 = vmul.f32 %v156, 1.442695
    %v181 = vpow.pop %v180
    %v182 = vmul.f32 %v157, 1.442695
    %v183 = vpow.pop %v182
    %v184 = vmul.f32 %v158, 1.442695
    %v185 = vpow.pop %v184
    %v186 = vmul.f32 %v159, 1.442695
    %v187 = vpow.pop %v186
    %v188 = vmul.f32 %v160, 1.442695
    %v189 = vpow.pop %v188
    %v190 = vmul.f32 %v161, 1.442695
    %v191 = vpow.pop %v190
    %v192 = vmul.f32 %v162, 1.442695
    %v193 = vpow.pop %v192
    %v194 = vmul.f32 %v163, 1.442695
    %v195 = vpow.pop %v194
    %v196 = vadd.f32 %v165, 1.0
    %v197 = vlog2.pop %v196
    %v198 = vmul.f32 %v197, 0.6931472
    %v199 = vmul.f32 -0.5, %v165
    %v200 = vadd.f32 %v199, 1.0
    %v201 = vmul.f32 %v200, %v165
    %v202 = vand.u32 2147483647, %v165
    %vm203 = vcmp.lt.f32.partialorder %v202, 0.0004427343
    %v204 = vsel %vm203, %v201, %v198
    %v205 = vadd.f32 %v167, 1.0
    %v206 = vlog2.pop %v205
    %v207 = vmul.f32 %v206, 0.6931472
    %v208 = vmul.f32 -0.5, %v167
    %v209 = vadd.f32 %v208, 1.0
    %v210 = vmul.f32 %v209, %v167
    %v211 = vand.u32 2147483647, %v167
    %vm212 = vcmp.lt.f32.partialorder %v211, 0.0004427343
    %v213 = vsel %vm212, %v210, %v207
    %v214 = vadd.f32 %v169, 1.0
    %v215 = vlog2.pop %v214
    %v216 = vmul.f32 %v215, 0.6931472
    %v217 = vmul.f32 -0.5, %v169
    %v218 = vadd.f32 %v217, 1.0
    %v219 = vmul.f32 %v218, %v169
    %v220 = vand.u32 2147483647, %v169
    %vm221 = vcmp.lt.f32.partialorder %v220, 0.0004427343
    %v222 = vsel %vm221, %v219, %v216
    %v223 = vadd.f32 %v171, 1.0
    %v224 = vlog2.pop %v223
    %v225 = vmul.f32 %v224, 0.6931472
    %v226 = vmul.f32 -0.5, %v171
    %v227 = vadd.f32 %v226, 1.0
    %v228 = vmul.f32 %v227, %v171
    %v229 = vand.u32 2147483647, %v171
    %vm230 = vcmp.lt.f32.partialorder %v229, 0.0004427343
    %v231 = vsel %vm230, %v228, %v225
    %v232 = vadd.f32 %v173, 1.0
    %v233 = vlog2.pop %v232
    %v234 = vmul.f32 %v233, 0.6931472
    %v235 = vmul.f32 -0.5, %v173
    %v236 = vadd.f32 %v235, 1.0
    %v237 = vmul.f32 %v236, %v173
    %v238 = vand.u32 2147483647, %v173
    %vm239 = vcmp.lt.f32.partialorder %v238, 0.0004427343
    %v240 = vsel %vm239, %v237, %v234
    %v241 = vadd.f32 %v175, 1.0
    %v242 = vlog2.pop %v241
    %v243 = vmul.f32 %v242, 0.6931472
    %v244 = vmul.f32 -0.5, %v175
    %v245 = vadd.f32 %v244, 1.0
    %v246 = vmul.f32 %v245, %v175
    %v247 = vand.u32 2147483647, %v175
    %vm248 = vcmp.lt.f32.partialorder %v247, 0.0004427343
    %v249 = vsel %vm248, %v246, %v243
    %v250 = vadd.f32 %v177, 1.0
    %v251 = vlog2.pop %v250
    %v252 = vmul.f32 %v251, 0.6931472
    %v253 = vmul.f32 -0.5, %v177
    %v254 = vadd.f32 %v253, 1.0
    %v255 = vmul.f32 %v254, %v177
    %v256 = vand.u32 2147483647, %v177
    %vm257 = vcmp.lt.f32.partialorder %v256, 0.0004427343
    %v258 = vsel %vm257, %v255, %v252
    %v259 = vadd.f32 %v179, 1.0
    %v260 = vlog2.pop %v259
    %v261 = vmul.f32 %v260, 0.6931472
    %v262 = vmul.f32 -0.5, %v179
    %v263 = vadd.f32 %v262, 1.0
    %v264 = vmul.f32 %v263, %v179
    %v265 = vand.u32 2147483647, %v179
    %vm266 = vcmp.lt.f32.partialorder %v265, 0.0004427343
    %v267 = vsel %vm266, %v264, %v261
    %v268 = vadd.f32 %v181, 1.0
    %v269 = vlog2.pop %v268
    %v270 = vmul.f32 %v269, 0.6931472
    %v271 = vmul.f32 -0.5, %v181
    %v272 = vadd.f32 %v271, 1.0
    %v273 = vmul.f32 %v272, %v181
    %v274 = vand.u32 2147483647, %v181
    %vm275 = vcmp.lt.f32.partialorder %v274, 0.0004427343
    %v276 = vsel %vm275, %v273, %v270
    %v277 = vadd.f32 %v183, 1.0
    %v278 = vlog2.pop %v277
    %v279 = vmul.f32 %v278, 0.6931472
    %v280 = vmul.f32 -0.5, %v183
    %v281 = vadd.f32 %v280, 1.0
    %v282 = vmul.f32 %v281, %v183
    %v283 = vand.u32 2147483647, %v183
    %vm284 = vcmp.lt.f32.partialorder %v283, 0.0004427343
    %v285 = vsel %vm284, %v282, %v279
    %v286 = vadd.f32 %v185, 1.0
    %v287 = vlog2.pop %v286
    %v288 = vmul.f32 %v287, 0.6931472
    %v289 = vmul.f32 -0.5, %v185
    %v290 = vadd.f32 %v289, 1.0
    %v291 = vmul.f32 %v290, %v185
    %v292 = vand.u32 2147483647, %v185
    %vm293 = vcmp.lt.f32.partialorder %v292, 0.0004427343
    %v294 = vsel %vm293, %v291, %v288
    %v295 = vadd.f32 %v187, 1.0
    %v296 = vlog2.pop %v295
    %v297 = vmul.f32 %v296, 0.6931472
    %v298 = vmul.f32 -0.5, %v187
    %v299 = vadd.f32 %v298, 1.0
    %v300 = vmul.f32 %v299, %v187
    %v301 = vand.u32 2147483647, %v187
    %vm302 = vcmp.lt.f32.partialorder %v301, 0.0004427343
    %v303 = vsel %vm302, %v300, %v297
    %v304 = vadd.f32 %v189, 1.0
    %v305 = vlog2.pop %v304
    %v306 = vmul.f32 %v305, 0.6931472
    %v307 = vmul.f32 -0.5, %v189
    %v308 = vadd.f32 %v307, 1.0
    %v309 = vmul.f32 %v308, %v189
    %v310 = vand.u32 2147483647, %v189
    %vm311 = vcmp.lt.f32.partialorder %v310, 0.0004427343
    %v312 = vsel %vm311, %v309, %v306
    %v313 = vadd.f32 %v191, 1.0
    %v314 = vlog2.pop %v313
    %v315 = vmul.f32 %v314, 0.6931472
    %v316 = vmul.f32 -0.5, %v191
    %v317 = vadd.f32 %v316, 1.0
    %v318 = vmul.f32 %v317, %v191
    %v319 = vand.u32 2147483647, %v191
    %vm320 = vcmp.lt.f32.partialorder %v319, 0.0004427343
    %v321 = vsel %vm320, %v318, %v315
    %v322 = vadd.f32 %v193, 1.0
    %v323 = vlog2.pop %v322
    %v324 = vmul.f32 %v323, 0.6931472
    %v325 = vmul.f32 -0.5, %v193
    %v326 = vadd.f32 %v325, 1.0
    %v327 = vmul.f32 %v326, %v193
    %v328 = vand.u32 2147483647, %v193
    %vm329 = vcmp.lt.f32.partialorder %v328, 0.0004427343
    %v330 = vsel %vm329, %v327, %v324
    %v331 = vadd.f32 %v195, 1.0
    %v332 = vlog2.pop %v331
    %v333 = vmul.f32 %v332, 0.6931472
    %v334 = vmul.f32 -0.5, %v195
    %v335 = vadd.f32 %v334, 1.0
    %v336 = vmul.f32 %v335, %v195
    %v337 = vand.u32 2147483647, %v195
    %vm338 = vcmp.lt.f32.partialorder %v337, 0.0004427343
    %v339 = vsel %vm338, %v336, %v333
    %v340 = vadd.f32 %v116, %v204
    %v341 = vadd.f32 %v117, %v213
    %v342 = vadd.f32 %v118, %v222
    %v343 = vadd.f32 %v119, %v231
    %v344 = vadd.f32 %v120, %v240
    %v345 = vadd.f32 %v121, %v249
    %v346 = vadd.f32 %v122, %v258
    %v347 = vadd.f32 %v123, %v267
    %v348 = vadd.f32 %v124, %v276
    %v349 = vadd.f32 %v125, %v285
    %v350 = vadd.f32 %v126, %v294
    %v351 = vadd.f32 %v127, %v303
    %v352 = vadd.f32 %v128, %v312
    %v353 = vadd.f32 %v129, %v321
    %v354 = vadd.f32 %v130, %v330
    %v355 = vadd.f32 %v131, %v339
    %v356 = vld [vmem:[#allocation8] sm:$0xff]
    %v357 = vld [vmem:[#allocation8 + $0x8] sm:$0xff]
    %v358 = vld [vmem:[#allocation8 + $0x10] sm:$0xff]
    %v359 = vld [vmem:[#allocation8 + $0x18] sm:$0xff]
    %v360 = vld [vmem:[#allocation8 + $0x20] sm:$0xff]
    %v361 = vld [vmem:[#allocation8 + $0x28] sm:$0xff]
    %v362 = vld [vmem:[#allocation8 + $0x30] sm:$0xff]
    %v363 = vld [vmem:[#allocation8 + $0x38] sm:$0xff]
    %v364 = vld [vmem:[#allocation8 + $0x40] sm:$0xff]
    %v365 = vld [vmem:[#allocation8 + $0x48] sm:$0xff]
    %v366 = vld [vmem:[#allocation8 + $0x50] sm:$0xff]
    %v367 = vld [vmem:[#allocation8 + $0x58] sm:$0xff]
    %v368 = vld [vmem:[#allocation8 + $0x60] sm:$0xff]
    %v369 = vld [vmem:[#allocation8 + $0x68] sm:$0xff]
    %v370 = vld [vmem:[#allocation8 + $0x70] sm:$0xff]
    %v371 = vld [vmem:[#allocation8 + $0x78] sm:$0xff]
    %v372 = vmul.f32 %v340, %v356
    %v373 = vmul.f32 %v341, %v357
    %v374 = vmul.f32 %v342, %v358
    %v375 = vmul.f32 %v343, %v359
    %v376 = vmul.f32 %v344, %v360
    %v377 = vmul.f32 %v345, %v361
    %v378 = vmul.f32 %v346, %v362
    %v379 = vmul.f32 %v347, %v363
    %v380 = vmul.f32 %v348, %v364
    %v381 = vmul.f32 %v349, %v365
    %v382 = vmul.f32 %v350, %v366
    %v383 = vmul.f32 %v351, %v367
    %v384 = vmul.f32 %v352, %v368
    %v385 = vmul.f32 %v353, %v369
    %v386 = vmul.f32 %v354, %v370
    %v387 = vmul.f32 %v355, %v371
    %v388 = vadd.f32 %v84, %v372
    %v389 = vadd.f32 %v85, %v373
    %v390 = vadd.f32 %v86, %v374
    %v391 = vadd.f32 %v87, %v375
    %v392 = vadd.f32 %v88, %v376
    %v393 = vadd.f32 %v89, %v377
    %v394 = vadd.f32 %v90, %v378
    %v395 = vadd.f32 %v91, %v379
    %v396 = vadd.f32 %v92, %v380
    %v397 = vadd.f32 %v93, %v381
    %v398 = vadd.f32 %v94, %v382
    %v399 = vadd.f32 %v95, %v383
    %v400 = vadd.f32 %v96, %v384
    %v401 = vadd.f32 %v97, %v385
    %v402 = vadd.f32 %v98, %v386
    %v403 = vadd.f32 %v99, %v387
    %v404 = vld [vmem:[#allocation2] sm:$0xff]
    %v405 = vpack.c.bf16 %v404, %v404
    %v406 = vpack.c.bf16 %v389, %v388
    %v407 = vpack.c.bf16 %v391, %v390
    %v408 = vpack.c.bf16 %v393, %v392
    %v409 = vpack.c.bf16 %v395, %v394
    %v410 = vpack.c.bf16 %v397, %v396
    %v411 = vpack.c.bf16 %v399, %v398
    %v412 = vpack.c.bf16 %v401, %v400
    %v413 = vpack.c.bf16 %v403, %v402
    %414 = vmatprep.subr.bf16.mxu0 0
    %415 = vmatpush1.bf16.xpose.msra.mxu0 %v406
    %416 = vmatprep.subr.bf16.mxu0 0
    %417 = vmatpush1.bf16.xpose.msra.mxu0 %v407
    %418 = vmatprep.subr.bf16.mxu0 0
    %419 = vmatpush1.bf16.xpose.msra.mxu0 %v408
    %420 = vmatprep.subr.bf16.mxu0 0
    %421 = vmatpush1.bf16.xpose.msra.mxu0 %v409
    %422 = vmatprep.subr.bf16.mxu0 0
    %423 = vmatpush1.bf16.xpose.msra.mxu0 %v410
    %424 = vmatprep.subr.bf16.mxu0 0
    %425 = vmatpush1.bf16.xpose.msra.mxu0 %v411
    %426 = vmatprep.subr.bf16.mxu0 0
    %427 = vmatpush1.bf16.xpose.msra.mxu0 %v412
    %428 = vmatprep.subr.bf16.mxu0 0
    %429 = vmatpush1.bf16.xpose.msra.mxu0 %v413
    %430 = vmatprep.subr.bf16.mxu0 0
    %431 = vmatpush1.bf16.xpose.msra.mxu0 0
    %432 = vmatprep.subr.bf16.mxu0 0
    %433 = vmatpush1.bf16.xpose.msra.mxu0 0
    %434 = vmatprep.subr.bf16.mxu0 0
    %435 = vmatpush1.bf16.xpose.msra.mxu0 0
    %436 = vmatprep.subr.bf16.mxu0 0
    %437 = vmatpush1.bf16.xpose.msra.mxu0 0
    %438 = vmatprep.subr.bf16.mxu0 0
    %439 = vmatpush1.bf16.xpose.msra.mxu0 0
    %440 = vmatprep.subr.bf16.mxu0 0
    %441 = vmatpush1.bf16.xpose.msra.mxu0 0
    %442 = vmatprep.subr.bf16.mxu0 0
    %443 = vmatpush1.bf16.xpose.msra.mxu0 0
    %444 = vmatprep.subr.bf16.mxu0 0
    %445 = vmatpush1.bf16.xpose.msra.mxu0 0
    %446 = vmatprep.mubr.bf16.mxu0 0
    %447 = vmatmul.mubr.bf16.gmra.mrb[0].mxu0 %v405
    %v448 = vpop.f32.mrb[0].mxu0
    %v449 = vadd.f32 0.0, %v448
    %v450 = vpop.f32.mrb[0].mxu0
    %v451 = vpop.f32.mrb[0].mxu0
    %v452 = vpop.f32.mrb[0].mxu0
    %453 = vdwg.mxu0
    %p454 = scmp.eq.s32.totalorder 0, 0
    // Predicated region
    $region46: #{tpu_custom_call.1} parent=1 // pred_check
      %p455 = pneg %p454
    $region47: #{tpu_custom_call.1} parent=1 // pred_check_branch
      %457 = sbr.rel (%p455) target = $region49
    $region48: #{tpu_custom_call.1} parent=1 // pred_region
      %458 = vst [vmem:[#allocation10] sm:$0xff] 0.0
      %459 = vst [vmem:[#allocation11] sm:$0x1] 0.0
    $region49: #{tpu_custom_call.1} parent=1 // pred_fallthru
      _
    %v460 = vld [vmem:[#allocation10] sm:$0xff]
    %v461 = vadd.f32 %v460, %v449
    %462 = vst [vmem:[#allocation10] sm:$0xff] %v461
    %vm463 = vcmp.lt.f32.partialorder %v100, -15.0
    %vm464 = vcmp.lt.f32.partialorder %v101, -15.0
    %vm465 = vcmp.lt.f32.partialorder %v102, -15.0
    %vm466 = vcmp.lt.f32.partialorder %v103, -15.0
    %vm467 = vcmp.lt.f32.partialorder %v104, -15.0
    %vm468 = vcmp.lt.f32.partialorder %v105, -15.0
    %vm469 = vcmp.lt.f32.partialorder %v106, -15.0
    %vm470 = vcmp.lt.f32.partialorder %v107, -15.0
    %vm471 = vcmp.lt.f32.partialorder %v108, -15.0
    %vm472 = vcmp.lt.f32.partialorder %v109, -15.0
    %vm473 = vcmp.lt.f32.partialorder %v110, -15.0
    %vm474 = vcmp.lt.f32.partialorder %v111, -15.0
    %vm475 = vcmp.lt.f32.partialorder %v112, -15.0
    %vm476 = vcmp.lt.f32.partialorder %v113, -15.0
    %vm477 = vcmp.lt.f32.partialorder %v114, -15.0
    %vm478 = vcmp.lt.f32.partialorder %v115, -15.0
    %v479 = vmax.f32 %v340, 1e-30
    %v480 = vmax.f32 %v341, 1e-30
    %v481 = vmax.f32 %v342, 1e-30
    %v482 = vmax.f32 %v343, 1e-30
    %v483 = vmax.f32 %v344, 1e-30
    %v484 = vmax.f32 %v345, 1e-30
    %v485 = vmax.f32 %v346, 1e-30
    %v486 = vmax.f32 %v347, 1e-30
    %v487 = vmax.f32 %v348, 1e-30
    %v488 = vmax.f32 %v349, 1e-30
    %v489 = vmax.f32 %v350, 1e-30
    %v490 = vmax.f32 %v351, 1e-30
    %v491 = vmax.f32 %v352, 1e-30
    %v492 = vmax.f32 %v353, 1e-30
    %v493 = vmax.f32 %v354, 1e-30
    %v494 = vmax.f32 %v355, 1e-30
    %v495 = vlog2.pop %v479
    %v496 = vmul.f32 %v495, 0.6931472
    %v497 = vlog2.pop %v480
    %v498 = vmul.f32 %v497, 0.6931472
    %v499 = vlog2.pop %v481
    %v500 = vmul.f32 %v499, 0.6931472
    %v501 = vlog2.pop %v482
    %v502 = vmul.f32 %v501, 0.6931472
    %v503 = vlog2.pop %v483
    %v504 = vmul.f32 %v503, 0.6931472
    %v505 = vlog2.pop %v484
    %v506 = vmul.f32 %v505, 0.6931472
    %v507 = vlog2.pop %v485
    %v508 = vmul.f32 %v507, 0.6931472
    %v509 = vlog2.pop %v486
    %v510 = vmul.f32 %v509, 0.6931472
    %v511 = vlog2.pop %v487
    %v512 = vmul.f32 %v511, 0.6931472
    %v513 = vlog2.pop %v488
    %v514 = vmul.f32 %v513, 0.6931472
    %v515 = vlog2.pop %v489
    %v516 = vmul.f32 %v515, 0.6931472
    %v517 = vlog2.pop %v490
    %v518 = vmul.f32 %v517, 0.6931472
    %v519 = vlog2.pop %v491
    %v520 = vmul.f32 %v519, 0.6931472
    %v521 = vlog2.pop %v492
    %v522 = vmul.f32 %v521, 0.6931472
    %v523 = vlog2.pop %v493
    %v524 = vmul.f32 %v523, 0.6931472
    %v525 = vlog2.pop %v494
    %v526 = vmul.f32 %v525, 0.6931472
    %v527 = vsel %vm463, %v100, %v496
    %v528 = vsel %vm464, %v101, %v498
    %v529 = vsel %vm465, %v102, %v500
    %v530 = vsel %vm466, %v103, %v502
    %v531 = vsel %vm467, %v104, %v504
    %v532 = vsel %vm468, %v105, %v506
    %v533 = vsel %vm469, %v106, %v508
    %v534 = vsel %vm470, %v107, %v510
    %v535 = vsel %vm471, %v108, %v512
    %v536 = vsel %vm472, %v109, %v514
    %v537 = vsel %vm473, %v110, %v516
    %v538 = vsel %vm474, %v111, %v518
    %v539 = vsel %vm475, %v112, %v520
    %v540 = vsel %vm476, %v113, %v522
    %v541 = vsel %vm477, %v114, %v524
    %v542 = vsel %vm478, %v115, %v526
    %v543 = vmul.f32 %v340, %v340
    %v544 = vmul.f32 %v341, %v341
    %v545 = vmul.f32 %v342, %v342
    %v546 = vmul.f32 %v343, %v343
    %v547 = vmul.f32 %v344, %v344
    %v548 = vmul.f32 %v345, %v345
    %v549 = vmul.f32 %v346, %v346
    %v550 = vmul.f32 %v347, %v347
    %v551 = vmul.f32 %v348, %v348
    %v552 = vmul.f32 %v349, %v349
    %v553 = vmul.f32 %v350, %v350
    %v554 = vmul.f32 %v351, %v351
    %v555 = vmul.f32 %v352, %v352
    %v556 = vmul.f32 %v353, %v353
    %v557 = vmul.f32 %v354, %v354
    %v558 = vmul.f32 %v355, %v355
    %v559 = vmul.f32 %v84, %v84
    %v560 = vmul.f32 %v85, %v85
    %v561 = vmul.f32 %v86, %v86
    %v562 = vmul.f32 %v87, %v87
    %v563 = vmul.f32 %v88, %v88
    %v564 = vmul.f32 %v89, %v89
    %v565 = vmul.f32 %v90, %v90
    %v566 = vmul.f32 %v91, %v91
    %v567 = vmul.f32 %v92, %v92
    %v568 = vmul.f32 %v93, %v93
    %v569 = vmul.f32 %v94, %v94
    %v570 = vmul.f32 %v95, %v95
    %v571 = vmul.f32 %v96, %v96
    %v572 = vmul.f32 %v97, %v97
    %v573 = vmul.f32 %v98, %v98
    %v574 = vmul.f32 %v99, %v99
    %v575 = vadd.f32 %v543, %v559
    %v576 = vadd.f32 %v544, %v560
    %v577 = vadd.f32 %v545, %v561
    %v578 = vadd.f32 %v546, %v562
    %v579 = vadd.f32 %v547, %v563
    %v580 = vadd.f32 %v548, %v564
    %v581 = vadd.f32 %v549, %v565
    %v582 = vadd.f32 %v550, %v566
    %v583 = vadd.f32 %v551, %v567
    %v584 = vadd.f32 %v552, %v568
    %v585 = vadd.f32 %v553, %v569
    %v586 = vadd.f32 %v554, %v570
    %v587 = vadd.f32 %v555, %v571
    %v588 = vadd.f32 %v556, %v572
    %v589 = vadd.f32 %v557, %v573
    %v590 = vadd.f32 %v558, %v574
    %v591 = vadd.f32 %v575, %v576
    %v592 = vadd.f32 %v591, %v577
    %v593 = vadd.f32 %v592, %v578
    %v594 = vadd.f32 %v593, %v579
    %v595 = vadd.f32 %v594, %v580
    %v596 = vadd.f32 %v595, %v581
    %v597 = vadd.f32 %v596, %v582
    %v598 = vadd.f32 %v597, %v583
    %v599 = vadd.f32 %v598, %v584
    %v600 = vadd.f32 %v599, %v585
    %v601 = vadd.f32 %v600, %v586
    %v602 = vadd.f32 %v601, %v587
    %v603 = vadd.f32 %v602, %v588
    %v604 = vadd.f32 %v603, %v589
    %v605 = vadd.f32 %v604, %v590
    %606 = vadd.xlane.f32.xlu0 %v605
    %v607 = vpop.xlane.xlu0 %606
    %v608 = vrot.slane %v607, 4
    %v609 = vadd.f32 %v607, %v608
    %v610 = vrot.slane %v609, 2
    %v611 = vadd.f32 %v609, %v610
    %v612 = vrot.slane %v611, 1
    %v613 = vadd.f32 %v611, %v612
    %s614 = vtos %v613
    %s615 = smul.f32 %s614, 0.5
    %v616 = vadd.f32 %v527, %v528
    %v617 = vadd.f32 %v616, %v529
    %v618 = vadd.f32 %v617, %v530
    %v619 = vadd.f32 %v618, %v531
    %v620 = vadd.f32 %v619, %v532
    %v621 = vadd.f32 %v620, %v533
    %v622 = vadd.f32 %v621, %v534
    %v623 = vadd.f32 %v622, %v535
    %v624 = vadd.f32 %v623, %v536
    %v625 = vadd.f32 %v624, %v537
    %v626 = vadd.f32 %v625, %v538
    %v627 = vadd.f32 %v626, %v539
    %v628 = vadd.f32 %v627, %v540
    %v629 = vadd.f32 %v628, %v541
    %v630 = vadd.f32 %v629, %v542
    %631 = vadd.xlane.f32.xlu0 %v630
    %v632 = vpop.xlane.xlu0 %631
    %v633 = vrot.slane %v632, 4
    %v634 = vadd.f32 %v632, %v633
    %v635 = vrot.slane %v634, 2
    %v636 = vadd.f32 %v634, %v635
    %v637 = vrot.slane %v636, 1
    %v638 = vadd.f32 %v636, %v637
    %s639 = vtos %v638
    %s640 = ssub.f32 %s615, %s639
    %v641 = vld [vmem:[#allocation11] sm:$0x1]
    %v642 = vstv %s640
    %v643 = vadd.f32 %v641, %v642
    %644 = vst [vmem:[#allocation11] sm:$0x1] %v643
    // Predicated region
    $region50: #{tpu_custom_call.1} parent=1 // pred_check
      %p645 = pneg %p454
    $region51: #{tpu_custom_call.1} parent=1 // pred_check_branch
      %647 = sbr.rel (%p645) target = $region53
    $region52: #{tpu_custom_call.1} parent=1 // pred_region
      %v648 = vld [vmem:[%s4] sm:$0x1]
      %v649 = vld [vmem:[%s5] sm:$0x1]
      %v650 = vmax.f32 %v649, 0.0
      %v651 = vand.u32 2147483647, %v649
      %v652 = vsub.f32 0.0, %v651
      %v653 = vmul.f32 %v652, 1.442695
      %v654 = vpow.pop %v653
      %v655 = vadd.f32 %v654, 1.0
      %v656 = vlog2.pop %v655
      %v657 = vmul.f32 %v656, 0.6931472
      %v658 = vmul.f32 -0.5, %v654
      %v659 = vadd.f32 %v658, 1.0
      %v660 = vmul.f32 %v659, %v654
      %v661 = vand.u32 2147483647, %v654
      %vm662 = vcmp.lt.f32.partialorder %v661, 0.0004427343
      %v663 = vsel %vm662, %v660, %v657
      %v664 = vadd.f32 %v650, %v663
      %v665 = vld [vmem:[%s6] sm:$0x1]
      %v666 = vmul.f32 %v664, %v665
      %v667 = vadd.f32 %v648, %v666
      %v668 = vld [vmem:[#allocation10] sm:$0xff]
      %v670 = vlaneseq
      %v671 = vshrl.u32 %v670, 7
      %v672 = vsub.s32 0, %v671
      %v673 = vrot.slane %v667, %v672
      %v675 = vadd.f32 %v668, %v673
      %676 = vst [vmem:[#allocation10] sm:$0xff] %v675
      %vm677 = vcmp.lt.f32.partialorder %v649, -15.0
      %v678 = vmax.f32 %v664, 1e-30
      %v679 = vlog2.pop %v678
      %v680 = vmul.f32 %v679, 0.6931472
      %v681 = vsel %vm677, %v649, %v680
      %v682 = vmul.f32 %v664, %v664
      %v683 = vmul.f32 %v648, %v648
      %v684 = vadd.f32 %v682, %v683
      %vm685 = vcmask 1040384
      %v686 = vsel %vm685, %v684, 0.0
      %687 = vadd.xlane.f32.xlu0 %v686
      %v688 = vpop.xlane.xlu0 %687
      %v689 = vrot.slane %v688, 4
      %v690 = vadd.f32 %v688, %v689
      %v691 = vrot.slane %v690, 2
      %v692 = vadd.f32 %v690, %v691
      %v693 = vrot.slane %v692, 1
      %v694 = vadd.f32 %v692, %v693
      %s695 = vtos %v694
      %s696 = smul.f32 %s695, 0.5
      %v697 = vsel %vm685, %v681, 0.0
      %698 = vadd.xlane.f32.xlu0 %v697
      %v699 = vpop.xlane.xlu0 %698
      %v700 = vrot.slane %v699, 4
      %v701 = vadd.f32 %v699, %v700
      %v702 = vrot.slane %v701, 2
      %v703 = vadd.f32 %v701, %v702
      %v704 = vrot.slane %v703, 1
      %v705 = vadd.f32 %v703, %v704
      %s706 = vtos %v705
      %s707 = ssub.f32 %s696, %s706
      %v708 = vld [vmem:[#allocation11] sm:$0x1]
      %v709 = vstv %s707
      %v710 = vadd.f32 %v708, %v709
      %711 = vst [vmem:[#allocation11] sm:$0x1] %v710
    $region53: #{tpu_custom_call.1} parent=1 // pred_fallthru
      _
    // Predicated region
    $region54: #{tpu_custom_call.1} parent=1 // pred_check
      _
    $region55: #{tpu_custom_call.1} parent=1 // pred_check_branch
      %713 = sbr.rel (0) target = $region57
    $region56: #{tpu_custom_call.1} parent=1 // pred_region
      %s715 = ssub.s32 128, 128
      %716 = vsyncadd [#allocation4], %s715
      %s718 = sshll.u32 [#allocation10], 4
      %s719 = int_to_ptr.vmem [resolvable:$true] %s718
      %721 = dma.vmem_to_hbm [thread:$0]  %s719, 128, %s7, [#allocation4]
    $region57: #{tpu_custom_call.1} parent=1 // pred_fallthru
      _
    // Predicated region
    $region58: #{tpu_custom_call.1} parent=1 // pred_check
      _
    $region59: #{tpu_custom_call.1} parent=1 // pred_check_branch
      %723 = sbr.rel (0) target = $region61
    $region60: #{tpu_custom_call.1} parent=1 // pred_region
      %s725 = ssub.s32 16, 16
      %726 = vsyncadd [#allocation12], %s725
      %s728 = sshll.u32 [#allocation11], 4
      %s729 = int_to_ptr.vmem [resolvable:$true] %s728
      %731 = dma.vmem_to_hbm [thread:$0]  %s729, 16, %s8, [#allocation12]
    $region61: #{tpu_custom_call.1} parent=1 // pred_fallthru
      _
    // Predicated region
    $region62: #{tpu_custom_call.1} parent=1 // pred_check
      _
    $region63: #{tpu_custom_call.1} parent=1 // pred_check_branch
      %733 = sbr.rel (0) target = $region65
    $region64: #{tpu_custom_call.1} parent=1 // pred_region
      %734 = dma.done [#allocation4], 128
    $region65: #{tpu_custom_call.1} parent=1 // pred_fallthru
      _
    // Predicated region
    $region66: #{tpu_custom_call.1} parent=1 // pred_check
      _
    $region67: #{tpu_custom_call.1} parent=1 // pred_check_branch
      %736 = sbr.rel (0) target = $region69
    $region68: #{tpu_custom_call.1} parent=1 // pred_region
      %737 = dma.done [#allocation12], 16
    $region69: #{tpu_custom_call.1} parent=1 // pred_fallthru
      _
    %738 = vsyncpa [#allocation3], 1
    %739 = vsyncpa [#allocation6], 1
    %740 = vsyncpa [#allocation9], 1
    %741 = vsyncpa [#allocation4], 1
    %742 = vsyncpa [#allocation12], 1

</llo_original>
